<compile_context>
chip_gen: v5e
topology: v5e:2x2
jax: 0.10.0
libtpu: 0.0.40
codegen_flags: <defaults>
</compile_context>

<pallas_src>
import jax
import jax.numpy as jnp
import numpy as np
from jax.experimental import pallas as pl
from jax.experimental.pallas import tpu as pltpu

_LANE = 128


def _round_up(v, m):
    return (v + m - 1) // m * m


def dqn_kernel(x_ref, w1_ref, w2_ref, w3_ref, b_ref, o_ref):
    hidden = w1_ref.shape[1]
    out_pad = w3_ref.shape[1]

    # Layer 1: Linear + ReLU (bf16 operands, f32 accumulate on the MXU).
    h1 = jnp.dot(x_ref[...], w1_ref[...], preferred_element_type=jnp.float32)
    h1 = jnp.maximum(h1 + b_ref[0:1, :hidden], 0.0)

    # Layer 2: Linear + ReLU.
    h2 = jnp.dot(h1.astype(w2_ref.dtype), w2_ref[...],
                 preferred_element_type=jnp.float32)
    h2 = jnp.maximum(h2 + b_ref[1:2, :hidden], 0.0)

    # Layer 3: Linear (Q-values, no activation).
    out = jnp.dot(h2.astype(w3_ref.dtype), w3_ref[...],
                  preferred_element_type=jnp.float32)
    o_ref[...] = (out + b_ref[2:3, :out_pad]).astype(o_ref.dtype)


def dqn_forward(x, params, *, compute_dtype=jnp.bfloat16, batch_tile=256):
    """x: (batch, input_size) f32. Returns (batch, output_size) f32 Q-values."""
    w1, b1, w2, b2, w3, b3 = params
    batch, in_dim = x.shape
    hidden = w1.shape[1]
    out_dim = w3.shape[1]

    # Lane-dense padded geometry.
    in_pad = _round_up(in_dim, _LANE)
    out_pad = _round_up(out_dim, _LANE)
    bias_w = max(hidden, out_pad)

    # Batch tile: multiple of 16 (bf16 sublane packing), capped at batch_tile.
    tb = min(batch_tile, _round_up(batch, 16))
    padded_batch = _round_up(batch, tb)
    num_tiles = padded_batch // tb

    def pad2(a, rows, cols):
        pr, pc = rows - a.shape[0], cols - a.shape[1]
        return jnp.pad(a, ((0, pr), (0, pc))) if (pr or pc) else a

    # Zero-pad (K padding contributes zero to the dot products).
    xp = pad2(x, padded_batch, in_pad).astype(compute_dtype)
    w1p = pad2(w1, in_pad, hidden).astype(compute_dtype)
    w2p = w2.astype(compute_dtype)
    w3p = pad2(w3, hidden, out_pad).astype(compute_dtype)

    # Pack the three biases into one small f32 buffer (single DMA stream).
    biases = jnp.zeros((3, bias_w), jnp.float32)
    biases = biases.at[0, :hidden].set(b1.reshape(-1))
    biases = biases.at[1, :hidden].set(b2.reshape(-1))
    biases = biases.at[2, :out_dim].set(b3.reshape(-1))

    const = lambda shape: pl.BlockSpec(shape, lambda i: (0, 0))

    out = pl.pallas_call(
        dqn_kernel,
        out_shape=jax.ShapeDtypeStruct((padded_batch, out_pad), jnp.float32),
        grid_spec=pltpu.PrefetchScalarGridSpec(
            num_scalar_prefetch=0,
            grid=(num_tiles,),
            in_specs=[
                pl.BlockSpec((tb, in_pad), lambda i: (i, 0)),   # x: tiled over batch
                const((in_pad, hidden)),                        # w1: VMEM-resident
                const((hidden, hidden)),                        # w2
                const((hidden, out_pad)),                       # w3
                const((3, bias_w)),                             # packed biases
            ],
            out_specs=pl.BlockSpec((tb, out_pad), lambda i: (i, 0)),
        ),
        compiler_params=pltpu.CompilerParams(
            dimension_semantics=("parallel",)),
    )(xp, w1p, w2p, w3p, biases)

    return out[:batch, :out_dim]


def init_params(key, input_size, output_size, hidden=128):
    # Deterministic init mimicking torch.nn.Linear default: U(-1/sqrt(fan_in), 1/sqrt(fan_in))
    ks = jax.random.split(key, 6)

    def lin(kw, kb, fan_in, fan_out):
        bound = 1.0 / np.sqrt(fan_in)
        w = jax.random.uniform(kw, (fan_in, fan_out), jnp.float32, -bound, bound)
        b = jax.random.uniform(kb, (1, fan_out), jnp.float32, -bound, bound)
        return w, b

    w1, b1 = lin(ks[0], ks[1], input_size, hidden)
    w2, b2 = lin(ks[2], ks[3], hidden, hidden)
    w3, b3 = lin(ks[4], ks[5], hidden, output_size)
    return (w1, b1, w2, b2, w3, b3)


if __name__ == "__main__":
    key = jax.random.PRNGKey(0)
    k_params, k_x = jax.random.split(key)

    batch, input_size, output_size = 8, 32, 8
    params = init_params(k_params, input_size, output_size)
    x = jax.random.normal(k_x, (batch, input_size), jnp.float32)

    out = dqn_forward(x, params)
    out = jax.block_until_ready(out)
    assert out.shape == (batch, output_size)

    # Reference check in plain JAX with the same bf16 rounding as the kernel.
    w1, b1, w2, b2, w3, b3 = params
    bf = lambda a: a.astype(jnp.bfloat16).astype(jnp.float32)
    h1 = jnp.maximum(bf(x) @ bf(w1) + b1, 0.0)
    h2 = jnp.maximum(bf(h1) @ bf(w2) + b2, 0.0)
    ref = bf(h2) @ bf(w3) + b3
    np.testing.assert_allclose(np.asarray(out), np.asarray(ref), rtol=2e-2, atol=2e-2)

    print("KERNEL_OK")
</pallas_src>

<mosaic_0001>
module attributes {stable_mosaic.version = 11 : i64} {
  func.func @dqn_kernel(%arg0: i32, %arg1: memref<16x128xbf16, #tpu.memory_space<vmem>>, %arg2: memref<128x128xbf16, #tpu.memory_space<vmem>>, %arg3: memref<128x128xbf16, #tpu.memory_space<vmem>>, %arg4: memref<128x128xbf16, #tpu.memory_space<vmem>>, %arg5: memref<3x128xf32, #tpu.memory_space<vmem>>, %arg6: memref<16x128xf32, #tpu.memory_space<vmem>>) attributes {dimension_semantics = [#tpu.dimension_semantics<parallel>], iteration_bounds = array<i64: 1>, scalar_prefetch = 0 : i64, scratch_operands = 0 : i64, tpu.core_type = #tpu.core_type<tc>, window_params = [{transform_indices = @transform_0, window_bounds = array<i64: 16, 128>}, {pipeline_mode = #tpu.pipeline_mode<synchronous>, transform_indices = @transform_1, window_bounds = array<i64: 128, 128>}, {pipeline_mode = #tpu.pipeline_mode<synchronous>, transform_indices = @transform_2, window_bounds = array<i64: 128, 128>}, {pipeline_mode = #tpu.pipeline_mode<synchronous>, transform_indices = @transform_3, window_bounds = array<i64: 128, 128>}, {pipeline_mode = #tpu.pipeline_mode<synchronous>, transform_indices = @transform_4, window_bounds = array<i64: 3, 128>}, {transform_indices = @transform_5, window_bounds = array<i64: 16, 128>}]} {
    %c0 = arith.constant 0 : index
    %c0_0 = arith.constant 0 : index
    %0 = vector.load %arg1[%c0, %c0_0] : memref<16x128xbf16, #tpu.memory_space<vmem>>, vector<16x128xbf16>
    %c0_1 = arith.constant 0 : index
    %c0_2 = arith.constant 0 : index
    %1 = vector.load %arg2[%c0_1, %c0_2] : memref<128x128xbf16, #tpu.memory_space<vmem>>, vector<128x128xbf16>
    %cst = arith.constant dense<0.000000e+00> : vector<16x128xf32>
    %2 = tpu.matmul %0, %1, %cst {dimension_numbers = #tpu.dot_dimension_numbers<[1], [0], [0], [1], [0, 0, 1, 1], [], []>} : vector<16x128xbf16>, vector<128x128xbf16>, vector<16x128xf32> -> vector<16x128xf32>
    %c0_3 = arith.constant 0 : index
    %c0_4 = arith.constant 0 : index
    %3 = vector.load %arg5[%c0_3, %c0_4] : memref<3x128xf32, #tpu.memory_space<vmem>>, vector<1x128xf32>
    %4 = vector.broadcast %3 : vector<1x128xf32> to vector<16x128xf32>
    %5 = arith.addf %2, %4 : vector<16x128xf32>
    %cst_5 = arith.constant 0.000000e+00 : f32
    %6 = vector.broadcast %cst_5 : f32 to vector<16x128xf32>
    %7 = arith.maximumf %5, %6 : vector<16x128xf32>
    %8 = arith.truncf %7 : vector<16x128xf32> to vector<16x128xbf16>
    %c0_6 = arith.constant 0 : index
    %c0_7 = arith.constant 0 : index
    %9 = vector.load %arg3[%c0_6, %c0_7] : memref<128x128xbf16, #tpu.memory_space<vmem>>, vector<128x128xbf16>
    %cst_8 = arith.constant dense<0.000000e+00> : vector<16x128xf32>
    %10 = tpu.matmul %8, %9, %cst_8 {dimension_numbers = #tpu.dot_dimension_numbers<[1], [0], [0], [1], [0, 0, 1, 1], [], []>} : vector<16x128xbf16>, vector<128x128xbf16>, vector<16x128xf32> -> vector<16x128xf32>
    %c1 = arith.constant 1 : index
    %c0_9 = arith.constant 0 : index
    %11 = vector.load %arg5[%c1, %c0_9] : memref<3x128xf32, #tpu.memory_space<vmem>>, vector<1x128xf32>
    %12 = vector.broadcast %11 : vector<1x128xf32> to vector<16x128xf32>
    %13 = arith.addf %10, %12 : vector<16x128xf32>
    %cst_10 = arith.constant 0.000000e+00 : f32
    %14 = vector.broadcast %cst_10 : f32 to vector<16x128xf32>
    %15 = arith.maximumf %13, %14 : vector<16x128xf32>
    %16 = arith.truncf %15 : vector<16x128xf32> to vector<16x128xbf16>
    %c0_11 = arith.constant 0 : index
    %c0_12 = arith.constant 0 : index
    %17 = vector.load %arg4[%c0_11, %c0_12] : memref<128x128xbf16, #tpu.memory_space<vmem>>, vector<128x128xbf16>
    %cst_13 = arith.constant dense<0.000000e+00> : vector<16x128xf32>
    %18 = tpu.matmul %16, %17, %cst_13 {dimension_numbers = #tpu.dot_dimension_numbers<[1], [0], [0], [1], [0, 0, 1, 1], [], []>} : vector<16x128xbf16>, vector<128x128xbf16>, vector<16x128xf32> -> vector<16x128xf32>
    %c2 = arith.constant 2 : index
    %c0_14 = arith.constant 0 : index
    %19 = vector.load %arg5[%c2, %c0_14] : memref<3x128xf32, #tpu.memory_space<vmem>>, vector<1x128xf32>
    %20 = vector.broadcast %19 : vector<1x128xf32> to vector<16x128xf32>
    %21 = arith.addf %18, %20 : vector<16x128xf32>
    %c0_15 = arith.constant 0 : index
    %c0_16 = arith.constant 0 : index
    %22 = vector.load %arg6[%c0_15, %c0_16] : memref<16x128xf32, #tpu.memory_space<vmem>>, vector<16x128xf32>
    tpu.vector_store %arg6[%c0_15, %c0_16], %21 {strides = array<i32>} : memref<16x128xf32, #tpu.memory_space<vmem>>, vector<16x128xf32>,
    return
  }
  func.func @transform_0(%arg0: i32) -> (i32, i32) {
    %c0_i32 = arith.constant 0 : i32
    %c0_i32_0 = arith.constant 0 : i32
    return %arg0, %c0_i32 : i32, i32
  }
  func.func @transform_1(%arg0: i32) -> (i32, i32) {
    %c0_i32 = arith.constant 0 : i32
    %c0_i32_0 = arith.constant 0 : i32
    %c0_i32_1 = arith.constant 0 : i32
    return %c0_i32, %c0_i32_0 : i32, i32
  }
  func.func @transform_2(%arg0: i32) -> (i32, i32) {
    %c0_i32 = arith.constant 0 : i32
    %c0_i32_0 = arith.constant 0 : i32
    %c0_i32_1 = arith.constant 0 : i32
    return %c0_i32, %c0_i32_0 : i32, i32
  }
  func.func @transform_3(%arg0: i32) -> (i32, i32) {
    %c0_i32 = arith.constant 0 : i32
    %c0_i32_0 = arith.constant 0 : i32
    %c0_i32_1 = arith.constant 0 : i32
    return %c0_i32, %c0_i32_0 : i32, i32
  }
  func.func @transform_4(%arg0: i32) -> (i32, i32) {
    %c0_i32 = arith.constant 0 : i32
    %c0_i32_0 = arith.constant 0 : i32
    %c0_i32_1 = arith.constant 0 : i32
    return %c0_i32, %c0_i32_0 : i32, i32
  }
  func.func @transform_5(%arg0: i32) -> (i32, i32) {
    %c0_i32 = arith.constant 0 : i32
    %c0_i32_0 = arith.constant 0 : i32
    return %arg0, %c0_i32 : i32, i32
  }
}

</mosaic_0001>

<llo_original>
// kernel: tpu_custom_call.1
$region0: #{tpu_custom_call.1}
  #allocation0 [shape = 'u32[]', space=smem, size = 0x4, offset = 0x4, fixed_abs, tag = 'smem constant byte address 0x4 - core index']
  #allocation1 [shape = 'u32[72,128]{1,0:T(1,128)}', space=vmem, size = 0x9000, scoped, tag = 'internal scratch']
  %s0 = inlined_call_operand.hbm [shape: bf16[16,128], index: 0, kind: input, shape index: {}]
  %s1 = inlined_call_operand.hbm [shape: bf16[128,128], index: 1, kind: input, shape index: {}]
  %s2 = inlined_call_operand.hbm [shape: bf16[128,128], index: 2, kind: input, shape index: {}]
  %s3 = inlined_call_operand.hbm [shape: bf16[128,128], index: 3, kind: input, shape index: {}]
  %s4 = inlined_call_operand.hbm [shape: f32[3,128], index: 4, kind: input, shape index: {}]
  %s5 = inlined_call_operand.hbm [shape: f32[16,128], index: 5, kind: output, shape index: {}]
  %s6 = sld [smem:[#allocation0]]
  $region50: #{tpu_custom_call.1} parent=0
    _
  %s8 = ssub.s32 1, %s6
  %s9 = scalar_select 0, %s8, %s6
  $region1: #{tpu_custom_call.1} parent=0
    #allocation2 [shape = 'u8[4096]{0}', space=vmem, size = 0x1000, scoped, tag = 'input window, operand 0, single buffered']
    #allocation3 [shape = 's32[1]{0}', space=sflag, size = 0x4, scoped, tag = 'scoped memory for tpu_custom_call.1']
    #allocation4 [shape = 's32[1]{0}', space=sflag, size = 0x4, scoped, tag = 'scoped memory for tpu_custom_call.1']
    #allocation5 [shape = 'u8[32768]{0}', space=vmem, size = 0x8000, scoped, tag = 'input window, operand 1, single buffered']
    #allocation6 [shape = 's32[1]{0}', space=sflag, size = 0x4, scoped, tag = 'scoped memory for tpu_custom_call.1']
    #allocation7 [shape = 'u8[32768]{0}', space=vmem, size = 0x8000, scoped, tag = 'input window, operand 2, single buffered']
    #allocation8 [shape = 'u8[32768]{0}', space=vmem, size = 0x8000, scoped, tag = 'input window, operand 3, single buffered']
    #allocation9 [shape = 's32[1]{0}', space=sflag, size = 0x4, scoped, tag = 'scoped memory for tpu_custom_call.1']
    #allocation10 [shape = 'u8[2048]{0}', space=vmem, size = 0x800, scoped, tag = 'input window, operand 4, single buffered']
    #allocation11 [shape = 'u8[8192]{0}', space=vmem, size = 0x2000, scoped, tag = 'output window, operand 0, single buffered']
    %10 = vsyncpa [#allocation3], 0
    %11 = vsyncpa [#allocation6], 0
    %12 = vsyncpa [#allocation9], 0
    %13 = vsyncpa [#allocation4], 0
    // Predicated region
    $region2: #{tpu_custom_call.1} parent=1 // pred_check
      _
    $region3: #{tpu_custom_call.1} parent=1 // pred_check_branch
      %15 = sbr.rel (0) target = $region5
    $region4: #{tpu_custom_call.1} parent=1 // pred_region
      %17 = vsyncadd [#allocation3], 0
      %s18 = sshll.u32 %s0, 4
      %s19 = int_to_ptr.hbm [resolvable:$true] %s18
      %s20 = sshll.u32 [#allocation2], 4
      %s21 = int_to_ptr.vmem [resolvable:$true] %s20
      %26 = dma.hbm_to_vmem [thread:$0]  %s19, 128, %s21, [#allocation3], 64, 64, 4
    $region5: #{tpu_custom_call.1} parent=1 // pred_fallthru
      _
    // Predicated region
    $region6: #{tpu_custom_call.1} parent=1 // pred_check
      _
    $region7: #{tpu_custom_call.1} parent=1 // pred_check_branch
      %28 = sbr.rel (0) target = $region9
    $region8: #{tpu_custom_call.1} parent=1 // pred_region
      %30 = vsyncadd [#allocation6], 0
      %s31 = sshll.u32 %s1, 4
      %s32 = int_to_ptr.hbm [resolvable:$true] %s31
      %s33 = sshll.u32 [#allocation5], 4
      %s34 = int_to_ptr.vmem [resolvable:$true] %s33
      %39 = dma.hbm_to_vmem [thread:$0]  %s32, 1024, %s34, [#allocation6], 64, 64, 4
    $region9: #{tpu_custom_call.1} parent=1 // pred_fallthru
      _
    // Predicated region
    $region10: #{tpu_custom_call.1} parent=1 // pred_check
      _
    $region11: #{tpu_custom_call.1} parent=1 // pred_check_branch
      %41 = sbr.rel (0) target = $region13
    $region12: #{tpu_custom_call.1} parent=1 // pred_region
      %43 = vsyncadd [#allocation6], 0
      %s44 = sshll.u32 %s2, 4
      %s45 = int_to_ptr.hbm [resolvable:$true] %s44
      %s46 = sshll.u32 [#allocation7], 4
      %s47 = int_to_ptr.vmem [resolvable:$true] %s46
      %52 = dma.hbm_to_vmem [thread:$0]  %s45, 1024, %s47, [#allocation6], 64, 64, 4
    $region13: #{tpu_custom_call.1} parent=1 // pred_fallthru
      _
    // Predicated region
    $region14: #{tpu_custom_call.1} parent=1 // pred_check
      _
    $region15: #{tpu_custom_call.1} parent=1 // pred_check_branch
      %54 = sbr.rel (0) target = $region17
    $region16: #{tpu_custom_call.1} parent=1 // pred_region
      %56 = vsyncadd [#allocation9], 0
      %s57 = sshll.u32 %s3, 4
      %s58 = int_to_ptr.hbm [resolvable:$true] %s57
      %s59 = sshll.u32 [#allocation8], 4
      %s60 = int_to_ptr.vmem [resolvable:$true] %s59
      %65 = dma.hbm_to_vmem [thread:$0]  %s58, 1024, %s60, [#allocation9], 64, 64, 4
    $region17: #{tpu_custom_call.1} parent=1 // pred_fallthru
      _
    // Predicated region
    $region18: #{tpu_custom_call.1} parent=1 // pred_check
      _
    $region19: #{tpu_custom_call.1} parent=1 // pred_check_branch
      %67 = sbr.rel (0) target = $region21
    $region20: #{tpu_custom_call.1} parent=1 // pred_region
      %69 = vsyncadd [#allocation9], 0
      %s71 = sshll.u32 %s4, 4
      %s72 = int_to_ptr.hbm [resolvable:$true] %s71
      %s73 = sshll.u32 [#allocation10], 4
      %s74 = int_to_ptr.vmem [resolvable:$true] %s73
      %76 = dma.hbm_to_vmem [thread:$0]  %s72, 64, %s74, [#allocation9]
    $region21: #{tpu_custom_call.1} parent=1 // pred_fallthru
      _
    // Predicated region
    $region22: #{tpu_custom_call.1} parent=1 // pred_check
      _
    $region23: #{tpu_custom_call.1} parent=1 // pred_check_branch
      %78 = sbr.rel (0) target = $region25
    $region24: #{tpu_custom_call.1} parent=1 // pred_region
      %80 = dma.done [#allocation3], 128
    $region25: #{tpu_custom_call.1} parent=1 // pred_fallthru
      _
    // Predicated region
    $region26: #{tpu_custom_call.1} parent=1 // pred_check
      _
    $region27: #{tpu_custom_call.1} parent=1 // pred_check_branch
      %82 = sbr.rel (0) target = $region29
    $region28: #{tpu_custom_call.1} parent=1 // pred_region
      %84 = dma.done [#allocation6], 1024
    $region29: #{tpu_custom_call.1} parent=1 // pred_fallthru
      _
    // Predicated region
    $region30: #{tpu_custom_call.1} parent=1 // pred_check
      _
    $region31: #{tpu_custom_call.1} parent=1 // pred_check_branch
      %86 = sbr.rel (0) target = $region33
    $region32: #{tpu_custom_call.1} parent=1 // pred_region
      %88 = dma.done [#allocation6], 1024
    $region33: #{tpu_custom_call.1} parent=1 // pred_fallthru
      _
    // Predicated region
    $region34: #{tpu_custom_call.1} parent=1 // pred_check
      _
    $region35: #{tpu_custom_call.1} parent=1 // pred_check_branch
      %90 = sbr.rel (0) target = $region37
    $region36: #{tpu_custom_call.1} parent=1 // pred_region
      %92 = dma.done [#allocation9], 1024
    $region37: #{tpu_custom_call.1} parent=1 // pred_fallthru
      _
    // Predicated region
    $region38: #{tpu_custom_call.1} parent=1 // pred_check
      _
    $region39: #{tpu_custom_call.1} parent=1 // pred_check_branch
      %94 = sbr.rel (0) target = $region41
    $region40: #{tpu_custom_call.1} parent=1 // pred_region
      %96 = dma.done [#allocation9], 64
    $region41: #{tpu_custom_call.1} parent=1 // pred_fallthru
      _
    %v97 = vld [vmem:[#allocation2] sm:$0xf]
    %v98 = vld [vmem:[#allocation2 + $0x4] sm:$0xf]
    %v99 = vld [vmem:[#allocation5] sm:$0xf]
    %v100 = vld [vmem:[#allocation5 + $0x4] sm:$0xf]
    %v101 = vld [vmem:[#allocation5 + $0x8] sm:$0xf]
    %v102 = vld [vmem:[#allocation5 + $0xc] sm:$0xf]
    %v103 = vld [vmem:[#allocation5 + $0x10] sm:$0xf]
    %v104 = vld [vmem:[#allocation5 + $0x14] sm:$0xf]
    %v105 = vld [vmem:[#allocation5 + $0x18] sm:$0xf]
    %v106 = vld [vmem:[#allocation5 + $0x1c] sm:$0xf]
    %v107 = vld [vmem:[#allocation5 + $0x20] sm:$0xf]
    %v108 = vld [vmem:[#allocation5 + $0x24] sm:$0xf]
    %v109 = vld [vmem:[#allocation5 + $0x28] sm:$0xf]
    %v110 = vld [vmem:[#allocation5 + $0x2c] sm:$0xf]
    %v111 = vld [vmem:[#allocation5 + $0x30] sm:$0xf]
    %v112 = vld [vmem:[#allocation5 + $0x34] sm:$0xf]
    %v113 = vld [vmem:[#allocation5 + $0x38] sm:$0xf]
    %v114 = vld [vmem:[#allocation5 + $0x3c] sm:$0xf]
    %v115 = vld [vmem:[#allocation10] sm:$0x1]
    %v116 = vperm.slane %v115, 0
    %v119 = vunpack.c.l.b16 %v97
    %v120 = vunpack.c.l.b16 %v98
    %v121 = vpack.c.b16 %v120, %v119
    %v139 = vunpack.c.l.b16 %v99
    %v140 = vunpack.c.l.b16 %v100
    %v141 = vunpack.c.l.b16 %v101
    %v142 = vunpack.c.l.b16 %v102
    %v143 = vunpack.c.l.b16 %v103
    %v144 = vunpack.c.l.b16 %v104
    %v145 = vunpack.c.l.b16 %v105
    %v146 = vunpack.c.l.b16 %v106
    %v147 = vunpack.c.l.b16 %v107
    %v148 = vunpack.c.l.b16 %v108
    %v149 = vunpack.c.l.b16 %v109
    %v150 = vunpack.c.l.b16 %v110
    %v151 = vunpack.c.l.b16 %v111
    %v152 = vunpack.c.l.b16 %v112
    %v153 = vunpack.c.l.b16 %v113
    %v154 = vunpack.c.l.b16 %v114
    %v155 = vpack.c.b16 %v140, %v139
    %v156 = vpack.c.b16 %v142, %v141
    %v157 = vpack.c.b16 %v144, %v143
    %v158 = vpack.c.b16 %v146, %v145
    %v159 = vpack.c.b16 %v148, %v147
    %v160 = vpack.c.b16 %v150, %v149
    %v161 = vpack.c.b16 %v152, %v151
    %v162 = vpack.c.b16 %v154, %v153
    %171 = vmatpush.bf16.msra.mxu0 %v162
    %172 = vmatpush.bf16.msra.mxu0 %v161
    %173 = vmatpush.bf16.msra.mxu0 %v160
    %174 = vmatpush.bf16.msra.mxu0 %v159
    %175 = vmatpush.bf16.msra.mxu0 %v158
    %176 = vmatpush.bf16.msra.mxu0 %v157
    %177 = vmatpush.bf16.msra.mxu0 %v156
    %178 = vmatpush.bf16.msra.mxu0 %v155
    %179 = vmatmul.bf16.gmra.mxu0 %v121
    %v180 = vpop.f32.mrf.mxu0
    %v181 = vadd.f32 %v116, %v180
    %v182 = vpop.f32.mrf.mxu0
    %v183 = vadd.f32 %v116, %v182
    %184 = vdwg.mxu0
    %v185 = vmax.f32 %v181, 0.0
    %v186 = vmax.f32 %v183, 0.0
    %v187 = vpack.c.bf16 %v186, %v185
    %v188 = vld [vmem:[#allocation7] sm:$0xf]
    %v189 = vld [vmem:[#allocation7 + $0x4] sm:$0xf]
    %v190 = vld [vmem:[#allocation7 + $0x8] sm:$0xf]
    %v191 = vld [vmem:[#allocation7 + $0xc] sm:$0xf]
    %v192 = vld [vmem:[#allocation7 + $0x10] sm:$0xf]
    %v193 = vld [vmem:[#allocation7 + $0x14] sm:$0xf]
    %v194 = vld [vmem:[#allocation7 + $0x18] sm:$0xf]
    %v195 = vld [vmem:[#allocation7 + $0x1c] sm:$0xf]
    %v196 = vld [vmem:[#allocation7 + $0x20] sm:$0xf]
    %v197 = vld [vmem:[#allocation7 + $0x24] sm:$0xf]
    %v198 = vld [vmem:[#allocation7 + $0x28] sm:$0xf]
    %v199 = vld [vmem:[#allocation7 + $0x2c] sm:$0xf]
    %v200 = vld [vmem:[#allocation7 + $0x30] sm:$0xf]
    %v201 = vld [vmem:[#allocation7 + $0x34] sm:$0xf]
    %v202 = vld [vmem:[#allocation7 + $0x38] sm:$0xf]
    %v203 = vld [vmem:[#allocation7 + $0x3c] sm:$0xf]
    %v204 = vld [vmem:[#allocation10 + $0x1] sm:$0x1]
    %v205 = vperm.slane %v204, 0
    %v222 = vunpack.c.l.b16 %v188
    %v223 = vunpack.c.l.b16 %v189
    %v224 = vunpack.c.l.b16 %v190
    %v225 = vunpack.c.l.b16 %v191
    %v226 = vunpack.c.l.b16 %v192
    %v227 = vunpack.c.l.b16 %v193
    %v228 = vunpack.c.l.b16 %v194
    %v229 = vunpack.c.l.b16 %v195
    %v230 = vunpack.c.l.b16 %v196
    %v231 = vunpack.c.l.b16 %v197
    %v232 = vunpack.c.l.b16 %v198
    %v233 = vunpack.c.l.b16 %v199
    %v234 = vunpack.c.l.b16 %v200
    %v235 = vunpack.c.l.b16 %v201
    %v236 = vunpack.c.l.b16 %v202
    %v237 = vunpack.c.l.b16 %v203
    %v238 = vpack.c.b16 %v223, %v222
    %v239 = vpack.c.b16 %v225, %v224
    %v240 = vpack.c.b16 %v227, %v226
    %v241 = vpack.c.b16 %v229, %v228
    %v242 = vpack.c.b16 %v231, %v230
    %v243 = vpack.c.b16 %v233, %v232
    %v244 = vpack.c.b16 %v235, %v234
    %v245 = vpack.c.b16 %v237, %v236
    %254 = vmatpush.bf16.msra.mxu0 %v245
    %255 = vmatpush.bf16.msra.mxu0 %v244
    %256 = vmatpush.bf16.msra.mxu0 %v243
    %257 = vmatpush.bf16.msra.mxu0 %v242
    %258 = vmatpush.bf16.msra.mxu0 %v241
    %259 = vmatpush.bf16.msra.mxu0 %v240
    %260 = vmatpush.bf16.msra.mxu0 %v239
    %261 = vmatpush.bf16.msra.mxu0 %v238
    %262 = vmatmul.bf16.gmra.mxu0 %v187
    %v263 = vpop.f32.mrf.mxu0
    %v264 = vadd.f32 %v205, %v263
    %v265 = vpop.f32.mrf.mxu0
    %v266 = vadd.f32 %v205, %v265
    %267 = vdwg.mxu0
    %v268 = vmax.f32 %v264, 0.0
    %v269 = vmax.f32 %v266, 0.0
    %v270 = vpack.c.bf16 %v269, %v268
    %v271 = vld [vmem:[#allocation8] sm:$0xf]
    %v272 = vld [vmem:[#allocation8 + $0x4] sm:$0xf]
    %v273 = vld [vmem:[#allocation8 + $0x8] sm:$0xf]
    %v274 = vld [vmem:[#allocation8 + $0xc] sm:$0xf]
    %v275 = vld [vmem:[#allocation8 + $0x10] sm:$0xf]
    %v276 = vld [vmem:[#allocation8 + $0x14] sm:$0xf]
    %v277 = vld [vmem:[#allocation8 + $0x18] sm:$0xf]
    %v278 = vld [vmem:[#allocation8 + $0x1c] sm:$0xf]
    %v279 = vld [vmem:[#allocation8 + $0x20] sm:$0xf]
    %v280 = vld [vmem:[#allocation8 + $0x24] sm:$0xf]
    %v281 = vld [vmem:[#allocation8 + $0x28] sm:$0xf]
    %v282 = vld [vmem:[#allocation8 + $0x2c] sm:$0xf]
    %v283 = vld [vmem:[#allocation8 + $0x30] sm:$0xf]
    %v284 = vld [vmem:[#allocation8 + $0x34] sm:$0xf]
    %v285 = vld [vmem:[#allocation8 + $0x38] sm:$0xf]
    %v286 = vld [vmem:[#allocation8 + $0x3c] sm:$0xf]
    %v287 = vld [vmem:[#allocation10 + $0x2] sm:$0x1]
    %v288 = vperm.slane %v287, 0
    %v305 = vunpack.c.l.b16 %v271
    %v306 = vunpack.c.l.b16 %v272
    %v307 = vunpack.c.l.b16 %v273
    %v308 = vunpack.c.l.b16 %v274
    %v309 = vunpack.c.l.b16 %v275
    %v310 = vunpack.c.l.b16 %v276
    %v311 = vunpack.c.l.b16 %v277
    %v312 = vunpack.c.l.b16 %v278
    %v313 = vunpack.c.l.b16 %v279
    %v314 = vunpack.c.l.b16 %v280
    %v315 = vunpack.c.l.b16 %v281
    %v316 = vunpack.c.l.b16 %v282
    %v317 = vunpack.c.l.b16 %v283
    %v318 = vunpack.c.l.b16 %v284
    %v319 = vunpack.c.l.b16 %v285
    %v320 = vunpack.c.l.b16 %v286
    %v321 = vpack.c.b16 %v306, %v305
    %v322 = vpack.c.b16 %v308, %v307
    %v323 = vpack.c.b16 %v310, %v309
    %v324 = vpack.c.b16 %v312, %v311
    %v325 = vpack.c.b16 %v314, %v313
    %v326 = vpack.c.b16 %v316, %v315
    %v327 = vpack.c.b16 %v318, %v317
    %v328 = vpack.c.b16 %v320, %v319
    %337 = vmatpush.bf16.msra.mxu0 %v328
    %338 = vmatpush.bf16.msra.mxu0 %v327
    %339 = vmatpush.bf16.msra.mxu0 %v326
    %340 = vmatpush.bf16.msra.mxu0 %v325
    %341 = vmatpush.bf16.msra.mxu0 %v324
    %342 = vmatpush.bf16.msra.mxu0 %v323
    %343 = vmatpush.bf16.msra.mxu0 %v322
    %344 = vmatpush.bf16.msra.mxu0 %v321
    %345 = vmatmul.bf16.gmra.mxu0 %v270
    %v346 = vpop.f32.mrf.mxu0
    %v347 = vadd.f32 %v288, %v346
    %v348 = vpop.f32.mrf.mxu0
    %v349 = vadd.f32 %v288, %v348
    %350 = vdwg.mxu0
    %351 = vst [vmem:[#allocation11] sm:$0xff] %v347
    %352 = vst [vmem:[#allocation11 + $0x8] sm:$0xff] %v349
    // Predicated region
    $region42: #{tpu_custom_call.1} parent=1 // pred_check
      _
    $region43: #{tpu_custom_call.1} parent=1 // pred_check_branch
      %354 = sbr.rel (0) target = $region45
    $region44: #{tpu_custom_call.1} parent=1 // pred_region
      %356 = vsyncadd [#allocation4], 0
      %s357 = sshll.u32 [#allocation11], 4
      %s358 = int_to_ptr.vmem [resolvable:$true] %s357
      %s359 = sshll.u32 %s5, 4
      %s360 = int_to_ptr.hbm [resolvable:$true] %s359
      %365 = dma.vmem_to_hbm [thread:$0]  %s358, 256, %s360, [#allocation4], 128, 128, 8
    $region45: #{tpu_custom_call.1} parent=1 // pred_fallthru
      _
    // Predicated region
    $region46: #{tpu_custom_call.1} parent=1 // pred_check
      _
    $region47: #{tpu_custom_call.1} parent=1 // pred_check_branch
      %367 = sbr.rel (0) target = $region49
    $region48: #{tpu_custom_call.1} parent=1 // pred_region
      %369 = dma.done [#allocation4], 256
    $region49: #{tpu_custom_call.1} parent=1 // pred_fallthru
      _
    %370 = vsyncpa [#allocation3], 1
    %371 = vsyncpa [#allocation6], 1
    %372 = vsyncpa [#allocation9], 1
    %373 = vsyncpa [#allocation4], 1

</llo_original>
